<compile_context>
chip_gen: v7x
topology: tpu7x:2x2x1
jax: 0.10.0
libtpu: 0.0.40
codegen_flags: <defaults>
</compile_context>

<pallas_src>
import functools
import math

import jax
import jax.numpy as jnp
from jax.experimental import pallas as pl
from jax.experimental.pallas import tpu as pltpu

EPS = 1e-5  # torch.nn.LayerNorm default eps


# --------------------------------------------------------------------------- helpers
def _gelu_tanh(x):
    # TODO(synk): torch nn.GELU() is the exact erf GELU; tanh approximation used here.
    c = math.sqrt(2.0 / math.pi)
    return 0.5 * x * (1.0 + jnp.tanh(c * (x + 0.044715 * (x * x * x))))


def _round_up(x, m):
    return (x + m - 1) // m * m


def _min_sublane(dtype):
    # dtype-aware second-minor granularity: fp32 -> 8, bf16 -> 16, int8/fp8 -> 32
    return 8 * (4 // jnp.dtype(dtype).itemsize)


def _pick_tm(n_rows, sub, tm):
    """Token tile: <= tm, multiple of sub, and (when possible) >= 2 tiles so
    both v7x TensorCores get work ("parallel" axis needs >= 2 blocks)."""
    tm = max(sub, min(_round_up(tm, sub), _round_up(n_rows, sub)))
    if _round_up(n_rows, tm) // tm < 2 and n_rows > sub:
        tm = min(tm, _round_up((n_rows + 1) // 2, sub))
    return tm


@functools.lru_cache(maxsize=None)
def _w_block_budget_bytes():
    """Generation-aware cap for one (K, tn) bf16 weight block (x2 when double-
    buffered): ~12 MiB on 128 MiB-VMEM parts (v5e/v6e), ~4 MiB on v7x."""
    try:
        cap = pltpu.get_tpu_info().vmem_capacity_bytes
    except Exception:
        cap = 64 << 20
    return (12 << 20) if cap >= (100 << 20) else (4 << 20)


# --------------------------------------------------------------------------- kernels
def _ln_rows(x, lnp):
    """LayerNorm over the last dim; x fp32, lnp packed (2, D) = [gamma; beta]."""
    k_inv = 1.0 / x.shape[-1]
    s1 = jnp.sum(x, axis=-1, keepdims=True)
    s2 = jnp.sum(x * x, axis=-1, keepdims=True)
    mean = s1 * k_inv
    var = jnp.maximum(s2 * k_inv - mean * mean, 0.0)
    xhat = (x - mean) * jax.lax.rsqrt(var + EPS)
    return xhat * lnp[0:1, :] + lnp[1:2, :]


def _make_fused_linear_kernel(has_ln, act, has_residual, has_post_ln, cache_ln):
    """out = [postLN]( act( [LN(x)] @ W_bf16 + bias ) [+ residual] )."""

    def kernel(*refs):
        it = iter(refs)
        x_ref = next(it)
        lnp_ref = next(it) if has_ln else None
        w_ref = next(it)
        b_ref = next(it)
        r_ref = next(it) if has_residual else None
        plnp_ref = next(it) if has_post_ln else None
        o_ref = next(it)
        h_ref = next(it) if cache_ln else None

        def ln_input_bf16():
            if has_ln:
                h = _ln_rows(x_ref[...].astype(jnp.float32),
                             lnp_ref[...].astype(jnp.float32))
                return h.astype(jnp.bfloat16)
            return x_ref[...].astype(jnp.bfloat16)

        if cache_ln:
            # LN (XLU sums + EUP rsqrt + cast) computed once per token tile,
            # reused for every output-feature tile j > 0.
            @pl.when(pl.program_id(1) == 0)
            def _():
                h_ref[...] = ln_input_bf16()
            hb = h_ref[...]
        else:
            hb = ln_input_bf16()

        # bf16 MXU matmul, fp32 accumulation.
        y = jnp.dot(hb, w_ref[...], preferred_element_type=jnp.float32)
        y = y + b_ref[...].astype(jnp.float32)
        if act == "gelu":
            y = _gelu_tanh(y)
        if has_residual:
            y = y + r_ref[...].astype(jnp.float32)
        if has_post_ln:
            y = _ln_rows(y, plnp_ref[...].astype(jnp.float32))
        o_ref[...] = y.astype(o_ref.dtype)

    return kernel


def _attention_kernel(qkv_ref, o_ref, *, d, heads, scale):
    # One batch's worth of heads per grid step, reading q/k/v directly from the
    # fused (T, 3d) QKV tile and writing a dense (T, d) tile in (token, feature)
    # layout for the following projection linear.
    x = qkv_ref[...]
    dh = d // heads
    outs = []
    for h in range(heads):  # static unroll over heads
        qh = x[:, h * dh:(h + 1) * dh].astype(jnp.bfloat16)
        kh = x[:, d + h * dh:d + (h + 1) * dh].astype(jnp.bfloat16)
        vh = x[:, 2 * d + h * dh:2 * d + (h + 1) * dh].astype(jnp.bfloat16)
        s = jax.lax.dot_general(qh, kh, (((1,), (1,)), ((), ())),
                                preferred_element_type=jnp.float32) * scale
        m = jnp.max(s, axis=-1, keepdims=True)
        p = jnp.exp(s - m)
        p = p * pl.reciprocal(jnp.sum(p, axis=-1, keepdims=True), approx=True)
        outs.append(jnp.dot(p.astype(jnp.bfloat16), vh,
                            preferred_element_type=jnp.float32))
    o_ref[...] = jnp.concatenate(outs, axis=-1).astype(o_ref.dtype)


# --------------------------------------------------------------------------- wrappers
def fused_linear(x2d, w, bias, *, ln_params=None, act=None, residual=None,
                 post_ln_params=None, tm=256, tn=None, out_dtype=None,
                 vmem_limit_bytes=None):
    """[postLN]( act( [LayerNorm(x2d)] @ W + bias ) [+ residual] ), tiled."""
    R, K = x2d.shape
    Kw, N = w.shape
    assert Kw == K
    out_dtype = out_dtype or x2d.dtype

    # Params are expected pre-cast (bf16 W, fp32 (1, N) bias); only fix up if not.
    if w.dtype != jnp.bfloat16:
        w = w.astype(jnp.bfloat16)
    if bias.ndim == 1:
        bias = bias.reshape(1, N)
    if bias.dtype != jnp.float32:
        bias = bias.astype(jnp.float32)

    # Token tile: dtype-aware sublane granularity across x / residual / output.
    sub = max(_min_sublane(x2d.dtype), _min_sublane(out_dtype),
              _min_sublane(residual.dtype) if residual is not None else 8)
    tm = _pick_tm(R, sub, tm)
    Rp = _round_up(R, tm)
    if Rp != R:
        x2d = jnp.pad(x2d, ((0, Rp - R), (0, 0)))
        if residual is not None:
            residual = jnp.pad(residual, ((0, Rp - R), (0, 0)))

    # Output-feature tile: largest 128-multiple divisor of N whose bf16 W block
    # fits the generation-aware budget (double-buffered by the pipeline).
    if tn is None:
        tn = N
        budget = _w_block_budget_bytes()
        if K * N * 2 > budget and N % 128 == 0:
            tn = 128
            t = 128
            while t <= N:
                if N % t == 0 and K * t * 2 <= budget:
                    tn = t
                t += 128
    assert tn == N or (tn % 128 == 0 and N % tn == 0), \
        "tn must be a 128-multiple divisor of N"
    n_j = N // tn
    assert post_ln_params is None or n_j == 1, \
        "post-LN fusion needs the full feature dim in one tile"

    has_ln = ln_params is not None
    has_res = residual is not None
    has_pln = post_ln_params is not None
    cache_ln = has_ln and n_j > 1

    in_specs = [pl.BlockSpec((tm, K), lambda i, j: (i, 0))]
    inputs = [x2d]
    if has_ln:
        in_specs.append(pl.BlockSpec((2, K), lambda i, j: (0, 0)))  # packed gamma/beta
        inputs.append(ln_params)
    in_specs.append(pl.BlockSpec((K, tn), lambda i, j: (0, j)))
    inputs.append(w)
    in_specs.append(pl.BlockSpec((1, tn), lambda i, j: (0, j)))
    inputs.append(bias)
    if has_res:
        in_specs.append(pl.BlockSpec((tm, tn), lambda i, j: (i, j)))
        inputs.append(residual)
    if has_pln:
        in_specs.append(pl.BlockSpec((2, tn), lambda i, j: (0, 0)))
        inputs.append(post_ln_params)

    scratch = [pltpu.VMEM((tm, K), jnp.bfloat16)] if cache_ln else []

    cp = dict(dimension_semantics=("parallel", "arbitrary" if cache_ln else "parallel"))
    if vmem_limit_bytes is not None:
        cp["vmem_limit_bytes"] = vmem_limit_bytes

    out = pl.pallas_call(
        _make_fused_linear_kernel(has_ln, act, has_res, has_pln, cache_ln),
        out_shape=jax.ShapeDtypeStruct((Rp, N), out_dtype),
        grid_spec=pltpu.PrefetchScalarGridSpec(
            num_scalar_prefetch=0,
            grid=(Rp // tm, n_j),
            in_specs=in_specs,
            out_specs=pl.BlockSpec((tm, tn), lambda i, j: (i, j)),
            scratch_shapes=scratch,
        ),
        compiler_params=pltpu.CompilerParams(**cp),
    )(*inputs)
    return out[:R] if Rp != R else out


def attention(qkv2d, bs, T, d, heads):
    """Multi-head softmax(q k^T * dh^-0.5) v reading the fused (bs*T, 3d) QKV
    buffer directly and writing (bs*T, d); one batch (all heads) per grid step.
    TODO(synk): switch to a KV-tiled online-softmax (flash) variant if T >= ~1024."""
    dh = d // heads
    kern = functools.partial(_attention_kernel, d=d, heads=heads, scale=dh ** -0.5)
    return pl.pallas_call(
        kern,
        out_shape=jax.ShapeDtypeStruct((bs * T, d), qkv2d.dtype),
        grid_spec=pltpu.PrefetchScalarGridSpec(
            num_scalar_prefetch=0,
            grid=(bs,),
            in_specs=[pl.BlockSpec((T, 3 * d), lambda b: (b, 0))],
            out_specs=pl.BlockSpec((T, d), lambda b: (b, 0)),
        ),
        compiler_params=pltpu.CompilerParams(dimension_semantics=("parallel",)),
    )(qkv2d)


# --------------------------------------------------------------------------- pure-JAX reference ops
def _ref_ln(v, p):
    v = v.astype(jnp.float32)
    k_inv = 1.0 / v.shape[-1]
    mean = jnp.sum(v, axis=-1, keepdims=True) * k_inv
    var = jnp.maximum(jnp.sum(v * v, axis=-1, keepdims=True) * k_inv - mean * mean, 0.0)
    return (v - mean) * jax.lax.rsqrt(var + EPS) * p[0:1] + p[1:2]


def ref_fused_linear(x2d, w, bias, *, ln_params=None, act=None, residual=None,
                     post_ln_params=None, out_dtype=None, **_):
    out_dtype = out_dtype or x2d.dtype
    h = _ref_ln(x2d, ln_params) if ln_params is not None else x2d.astype(jnp.float32)
    y = jnp.dot(h.astype(jnp.bfloat16), w.astype(jnp.bfloat16),
                preferred_element_type=jnp.float32)
    y = y + bias.reshape(1, -1).astype(jnp.float32)
    if act == "gelu":
        y = _gelu_tanh(y)
    if residual is not None:
        y = y + residual.astype(jnp.float32)
    if post_ln_params is not None:
        y = _ref_ln(y, post_ln_params)
    return y.astype(out_dtype)


def ref_attention(qkv2d, bs, T, d, heads):
    dh = d // heads
    scale = dh ** -0.5
    x = qkv2d.reshape(bs, T, 3 * d)
    q = x[..., :d].reshape(bs, T, heads, dh).transpose(0, 2, 1, 3)
    k = x[..., d:2 * d].reshape(bs, T, heads, dh).transpose(0, 2, 1, 3)
    v = x[..., 2 * d:].reshape(bs, T, heads, dh).transpose(0, 2, 1, 3)
    s = jnp.einsum("bhqd,bhkd->bhqk", q.astype(jnp.bfloat16), k.astype(jnp.bfloat16),
                   preferred_element_type=jnp.float32) * scale
    p = jax.nn.softmax(s, axis=-1)
    o = jnp.einsum("bhqk,bhkd->bhqd", p.astype(jnp.bfloat16), v.astype(jnp.bfloat16),
                   preferred_element_type=jnp.float32)
    return o.transpose(0, 2, 1, 3).reshape(bs * T, d).astype(qkv2d.dtype)


# --------------------------------------------------------------------------- model glue
def spatial_shift1(x):
    # Functional version of the in-place torch shift (borders keep original values).
    _, w, h, c = x.shape
    q = c // 4
    g0 = jnp.concatenate([x[:, :1, :, 0 * q:1 * q], x[:, :w - 1, :, 0 * q:1 * q]], axis=1)
    g1 = jnp.concatenate([x[:, 1:, :, 1 * q:2 * q], x[:, w - 1:, :, 1 * q:2 * q]], axis=1)
    g2 = jnp.concatenate([x[:, :, :1, 2 * q:3 * q], x[:, :, :h - 1, 2 * q:3 * q]], axis=2)
    g3 = jnp.concatenate([x[:, :, 1:, 3 * q:], x[:, :, h - 1:, 3 * q:]], axis=2)
    return jnp.concatenate([g0, g1, g2, g3], axis=-1)


def spatial_shift2(x):
    _, w, h, c = x.shape
    q = c // 4
    g0 = jnp.concatenate([x[:, :, :1, 0 * q:1 * q], x[:, :, :h - 1, 0 * q:1 * q]], axis=2)
    g1 = jnp.concatenate([x[:, :, 1:, 1 * q:2 * q], x[:, :, h - 1:, 1 * q:2 * q]], axis=2)
    g2 = jnp.concatenate([x[:, :1, :, 2 * q:3 * q], x[:, :w - 1, :, 2 * q:3 * q]], axis=1)
    g3 = jnp.concatenate([x[:, 1:, :, 3 * q:], x[:, w - 1:, :, 3 * q:]], axis=1)
    return jnp.concatenate([g0, g1, g2, g3], axis=-1)


def gpt_forward(params, rgb_fea, ir_fea, cfg, linear_fn, attn_fn):
    """GPT.forward (inference: all Dropout layers are identity)."""
    bs, c, H, W = rgb_fea.shape
    va, ha, d, heads = cfg["va"], cfg["ha"], cfg["d_model"], cfg["heads"]
    assert c == d and H % va == 0 and W % ha == 0
    T = 2 * va * ha
    C2 = 2 * d

    # TODO(synk): AdaptiveAvgPool2d reproduced as exact block mean (H, W divisible by anchors).
    def avgpool(t):
        return t.reshape(bs, c, va, H // va, ha, W // ha).mean(axis=(3, 5))

    tok = jnp.concatenate([avgpool(rgb_fea).reshape(bs, c, va * ha),
                           avgpool(ir_fea).reshape(bs, c, va * ha)], axis=2)
    x2 = (params["pos_emb"] + jnp.transpose(tok, (0, 2, 1))).reshape(bs * T, d)

    # ---- transformer blocks (sr_ratio == 1 path) ----
    # TODO(synk): SelfAttention's sr_ratio > 1 strided-Conv2d branch is not implemented.
    n_blocks = len(params["blocks"])
    for li, p in enumerate(params["blocks"]):
        qkv = linear_fn(x2, p["w_qkv"], p["b_qkv"], ln_params=p["ln_in"],
                        out_dtype=jnp.bfloat16)                      # ln_input + fused q/kv
        a = attn_fn(qkv, bs, T, d, heads)                            # (bs*T, d) bf16
        x2 = linear_fn(a, p["w_proj"], p["b_proj"], residual=x2,
                       out_dtype=jnp.float32)                        # proj + residual
        h1 = linear_fn(x2, p["w_fc1"], p["b_fc1"], ln_params=p["ln_out"],
                       act="gelu", out_dtype=jnp.bfloat16)
        x2 = linear_fn(h1, p["w_fc2"], p["b_fc2"], residual=x2, out_dtype=jnp.float32,
                       post_ln_params=params["ln_f"] if li == n_blocks - 1 else None)
    # x2 now holds ln_f(trans_blocks(x)) -- ln_f fused into the last fc2 epilogue.

    # tokens -> per-pixel [rgb | ir] feature rows (bs*va*ha, 2d)
    x3 = x2.reshape(bs, 2, va * ha, d)
    xs_flat = jnp.concatenate([x3[:, 0], x3[:, 1]], axis=-1).reshape(bs * va * ha, C2)

    # ---- S2Block(2d): PreNormResidual(S2Attention) + LayerNorm (fused post-LN) ----
    sp = params["s2"]
    h1 = linear_fn(xs_flat, sp["w_mlp1"], sp["b_mlp1"], ln_params=sp["prenorm_ln"])
    h1 = h1.reshape(bs, va, ha, 3 * C2)
    x_all = jnp.stack([spatial_shift1(h1[..., :C2]),
                       spatial_shift2(h1[..., C2:2 * C2]),
                       h1[..., 2 * C2:]], axis=1).reshape(bs, 3, va * ha, C2)
    # SplitAttention's tiny (bs, C2) matmuls stay in plain JAX (launch cost > work).
    a_vec = jnp.sum(x_all, axis=(1, 2))
    z = jax.nn.gelu(jnp.dot(a_vec, sp["split_w1"]), approximate=False)
    hat_a = jnp.dot(z, sp["split_w2"]).reshape(bs, 3, C2)
    bar_a = jax.nn.softmax(hat_a, axis=1)
    s2_out = jnp.sum(bar_a[:, :, None, :] * x_all, axis=1).reshape(bs * va * ha, C2)
    xs_flat = linear_fn(s2_out, sp["w_mlp2"], sp["b_mlp2"], residual=xs_flat,
                        post_ln_params=sp["norm_ln"], out_dtype=jnp.float32)

    # ---- both 1x1 map convs fused into one per-pixel linear, then upsample ----
    both = linear_fn(xs_flat, params["map_w"], params["map_b"])
    rgb_out = jnp.transpose(both[:, :d].reshape(bs, va, ha, d), (0, 3, 1, 2))
    ir_out = jnp.transpose(both[:, d:].reshape(bs, va, ha, d), (0, 3, 1, 2))
    # TODO(synk): F.interpolate(mode='bilinear', align_corners=False) mapped to jax.image.resize.
    rgb_out = jax.image.resize(rgb_out, (bs, d, H, W), method="bilinear")
    ir_out = jax.image.resize(ir_out, (bs, d, H, W), method="bilinear")
    return rgb_out, ir_out


def init_params(key, cfg):
    d, heads, exp, va, ha = cfg["d_model"], cfg["heads"], cfg["block_exp"], cfg["va"], cfg["ha"]
    C2 = 2 * d
    keys = iter(jax.random.split(key, 96))

    # Weights stored pre-cast to bf16 (MXU operand dtype); biases pre-shaped (1, N) fp32.
    def w(kin, kout):
        return (jax.random.normal(next(keys), (kin, kout), jnp.float32) * 0.02
                ).astype(jnp.bfloat16)

    def b(n):
        return jax.random.normal(next(keys), (1, n), jnp.float32) * 0.01

    def ln(dim):  # packed (2, dim): row 0 = gamma (1.0), row 1 = beta (0.0)
        return jnp.stack([jnp.ones((dim,), jnp.float32), jnp.zeros((dim,), jnp.float32)])

    blocks = []
    for _ in range(cfg["n_layer"]):
        blocks.append(dict(
            ln_in=ln(d), ln_out=ln(d),
            w_qkv=w(d, 3 * d), b_qkv=b(3 * d),    # [W_q | W_kv]
            w_proj=w(d, d), b_proj=b(d),
            w_fc1=w(d, exp * d), b_fc1=b(exp * d),
            w_fc2=w(exp * d, d), b_fc2=b(d),
        ))

    map_w_rgb, map_b_rgb = w(C2, d), b(d)
    map_w_ir, map_b_ir = w(C2, d), b(d)
    return dict(
        pos_emb=jax.random.normal(next(keys), (1, 2 * va * ha, d), jnp.float32) * 0.02,
        blocks=blocks,
        ln_f=ln(d),
        s2=dict(
            prenorm_ln=ln(C2),
            w_mlp1=w(C2, 3 * C2), b_mlp1=b(3 * C2),
            split_w1=jax.random.normal(next(keys), (C2, C2), jnp.float32) * 0.02,     # bias=False
            split_w2=jax.random.normal(next(keys), (C2, 3 * C2), jnp.float32) * 0.02, # bias=False
            w_mlp2=w(C2, C2), b_mlp2=b(C2),
            norm_ln=ln(C2),
        ),
        # mapconv_rgb / mapconv_ir fused along the output-feature axis
        map_w=jnp.concatenate([map_w_rgb, map_w_ir], axis=1),
        map_b=jnp.concatenate([map_b_rgb, map_b_ir], axis=1),
    )


if __name__ == "__main__":
    cfg = dict(d_model=32, heads=4, block_exp=4, n_layer=2, va=4, ha=4)
    bs, H, W = 2, 16, 16

    key = jax.random.PRNGKey(0)
    k_rgb, k_ir, k_par = jax.random.split(key, 3)
    rgb_fea = jax.random.normal(k_rgb, (bs, cfg["d_model"], H, W), jnp.float32)
    ir_fea = jax.random.normal(k_ir, (bs, cfg["d_model"], H, W), jnp.float32)
    params = init_params(k_par, cfg)

    rgb_out, ir_out = gpt_forward(params, rgb_fea, ir_fea, cfg, fused_linear, attention)
    rgb_out, ir_out = jax.block_until_ready((rgb_out, ir_out))

    rgb_ref, ir_ref = gpt_forward(params, rgb_fea, ir_fea, cfg, ref_fused_linear, ref_attention)
    rgb_ref, ir_ref = jax.block_until_ready((rgb_ref, ir_ref))

    assert rgb_out.shape == (bs, cfg["d_model"], H, W)
    assert ir_out.shape == (bs, cfg["d_model"], H, W)
    assert jnp.allclose(rgb_out, rgb_ref, atol=5e-3, rtol=5e-3), "rgb mismatch vs reference"
    assert jnp.allclose(ir_out, ir_ref, atol=5e-3, rtol=5e-3), "ir mismatch vs reference"

    print("KERNEL_OK")
</pallas_src>

<mosaic_0001>
module attributes {stable_mosaic.version = 11 : i64} {
  func.func @kernel(%arg0: i32, %arg1: i32, %arg2: memref<32x32xf32, #tpu.memory_space<vmem>>, %arg3: memref<2x32xf32, #tpu.memory_space<vmem>>, %arg4: memref<32x96xbf16, #tpu.memory_space<vmem>>, %arg5: memref<1x96xf32, #tpu.memory_space<vmem>>, %arg6: memref<32x96xbf16, #tpu.memory_space<vmem>>) attributes {dimension_semantics = [#tpu.dimension_semantics<parallel>, #tpu.dimension_semantics<parallel>], iteration_bounds = array<i64: 2, 1>, scalar_prefetch = 0 : i64, scratch_operands = 0 : i64, tpu.core_type = #tpu.core_type<tc>, window_params = [{transform_indices = @transform_0, window_bounds = array<i64: 32, 32>}, {pipeline_mode = #tpu.pipeline_mode<synchronous>, transform_indices = @transform_1, window_bounds = array<i64: 2, 32>}, {transform_indices = @transform_2, window_bounds = array<i64: 32, 96>}, {transform_indices = @transform_3, window_bounds = array<i64: 1, 96>}, {transform_indices = @transform_4, window_bounds = array<i64: 32, 96>}]} {
    %c0 = arith.constant 0 : index
    %c0_0 = arith.constant 0 : index
    %0 = vector.load %arg2[%c0, %c0_0] : memref<32x32xf32, #tpu.memory_space<vmem>>, vector<32x32xf32>
    %c0_1 = arith.constant 0 : index
    %c0_2 = arith.constant 0 : index
    %1 = vector.load %arg3[%c0_1, %c0_2] : memref<2x32xf32, #tpu.memory_space<vmem>>, vector<2x32xf32>
    %cst = arith.constant dense<0.000000e+00> : vector<32xf32>
    %2 = vector.multi_reduction <add>, %0, %cst [1] : vector<32x32xf32> to vector<32xf32>
    %3 = vector.shape_cast %2 : vector<32xf32> to vector<32x1xf32>
    %4 = arith.mulf %0, %0 : vector<32x32xf32>
    %cst_3 = arith.constant dense<0.000000e+00> : vector<32xf32>
    %5 = vector.multi_reduction <add>, %4, %cst_3 [1] : vector<32x32xf32> to vector<32xf32>
    %6 = vector.shape_cast %5 : vector<32xf32> to vector<32x1xf32>
    %cst_4 = arith.constant 3.125000e-02 : f32
    %7 = vector.broadcast %cst_4 : f32 to vector<32x1xf32>
    %8 = arith.mulf %3, %7 : vector<32x1xf32>
    %cst_5 = arith.constant 3.125000e-02 : f32
    %9 = vector.broadcast %cst_5 : f32 to vector<32x1xf32>
    %10 = arith.mulf %6, %9 : vector<32x1xf32>
    %11 = arith.mulf %8, %8 : vector<32x1xf32>
    %12 = arith.subf %10, %11 : vector<32x1xf32>
    %cst_6 = arith.constant 0.000000e+00 : f32
    %13 = vector.broadcast %cst_6 : f32 to vector<32x1xf32>
    %14 = arith.maximumf %12, %13 : vector<32x1xf32>
    %15 = vector.broadcast %8 : vector<32x1xf32> to vector<32x32xf32>
    %16 = arith.subf %0, %15 : vector<32x32xf32>
    %cst_7 = arith.constant 9.99999974E-6 : f32
    %17 = vector.broadcast %cst_7 : f32 to vector<32x1xf32>
    %18 = arith.addf %14, %17 : vector<32x1xf32>
    %19 = math.rsqrt %18 : vector<32x1xf32>
    %20 = vector.broadcast %19 : vector<32x1xf32> to vector<32x32xf32>
    %21 = arith.mulf %16, %20 : vector<32x32xf32>
    %22 = vector.extract_strided_slice %1 {offsets = [0, 0], sizes = [1, 32], strides = [1, 1]} : vector<2x32xf32> to vector<1x32xf32>
    %23 = vector.broadcast %22 : vector<1x32xf32> to vector<32x32xf32>
    %24 = arith.mulf %21, %23 : vector<32x32xf32>
    %25 = vector.extract_strided_slice %1 {offsets = [1, 0], sizes = [1, 32], strides = [1, 1]} : vector<2x32xf32> to vector<1x32xf32>
    %26 = vector.broadcast %25 : vector<1x32xf32> to vector<32x32xf32>
    %27 = arith.addf %24, %26 : vector<32x32xf32>
    %28 = arith.truncf %27 : vector<32x32xf32> to vector<32x32xbf16>
    %c0_8 = arith.constant 0 : index
    %c0_9 = arith.constant 0 : index
    %29 = vector.load %arg4[%c0_8, %c0_9] : memref<32x96xbf16, #tpu.memory_space<vmem>>, vector<32x96xbf16>
    %cst_10 = arith.constant dense<0.000000e+00> : vector<32x96xf32>
    %30 = tpu.matmul %28, %29, %cst_10 {dimension_numbers = #tpu.dot_dimension_numbers<[1], [0], [0], [1], [0, 0, 1, 1], [], []>} : vector<32x32xbf16>, vector<32x96xbf16>, vector<32x96xf32> -> vector<32x96xf32>
    %c0_11 = arith.constant 0 : index
    %c0_12 = arith.constant 0 : index
    %31 = vector.load %arg5[%c0_11, %c0_12] : memref<1x96xf32, #tpu.memory_space<vmem>>, vector<1x96xf32>
    %32 = vector.broadcast %31 : vector<1x96xf32> to vector<32x96xf32>
    %33 = arith.addf %30, %32 : vector<32x96xf32>
    %34 = arith.truncf %33 : vector<32x96xf32> to vector<32x96xbf16>
    %c0_13 = arith.constant 0 : index
    %c0_14 = arith.constant 0 : index
    %35 = vector.load %arg6[%c0_13, %c0_14] : memref<32x96xbf16, #tpu.memory_space<vmem>>, vector<32x96xbf16>
    tpu.vector_store %arg6[%c0_13, %c0_14], %34 {strides = array<i32>} : memref<32x96xbf16, #tpu.memory_space<vmem>>, vector<32x96xbf16>,
    return
  }
  func.func @transform_0(%arg0: i32, %arg1: i32) -> (i32, i32) {
    %c0_i32 = arith.constant 0 : i32
    %c0_i32_0 = arith.constant 0 : i32
    return %arg0, %c0_i32 : i32, i32
  }
  func.func @transform_1(%arg0: i32, %arg1: i32) -> (i32, i32) {
    %c0_i32 = arith.constant 0 : i32
    %c0_i32_0 = arith.constant 0 : i32
    %c0_i32_1 = arith.constant 0 : i32
    return %c0_i32, %c0_i32_0 : i32, i32
  }
  func.func @transform_2(%arg0: i32, %arg1: i32) -> (i32, i32) {
    %c0_i32 = arith.constant 0 : i32
    %c0_i32_0 = arith.constant 0 : i32
    return %c0_i32, %arg1 : i32, i32
  }
  func.func @transform_3(%arg0: i32, %arg1: i32) -> (i32, i32) {
    %c0_i32 = arith.constant 0 : i32
    %c0_i32_0 = arith.constant 0 : i32
    return %c0_i32, %arg1 : i32, i32
  }
  func.func @transform_4(%arg0: i32, %arg1: i32) -> (i32, i32) {
    %c0_i32 = arith.constant 0 : i32
    return %arg0, %arg1 : i32, i32
  }
}

</mosaic_0001>

<llo_original>
// kernel: tpu_custom_call.1
$region0: #{tpu_custom_call.1}
  #allocation0 [shape = 'u32[]', space=smem, size = 0x4, offset = 0x4, fixed_abs, tag = 'smem constant byte address 0x4 - core index']
  #allocation1 [shape = 'u32[144,128]{1,0:T(1,128)}', space=vmem, size = 0x12000, scoped, tag = 'internal scratch']
  %s0 = inlined_call_operand.vmem [shape: f32[64,32], index: 0, kind: input, shape index: {}]
  %s1 = inlined_call_operand.vmem [shape: f32[2,32], index: 1, kind: input, shape index: {}]
  %s2 = inlined_call_operand.vmem [shape: bf16[32,96], index: 2, kind: input, shape index: {}]
  %s3 = inlined_call_operand.vmem [shape: f32[1,96], index: 3, kind: input, shape index: {}]
  %s4 = inlined_call_operand.hbm [shape: bf16[64,96], index: 4, kind: output, shape index: {}]
  %s5 = sld [smem:[#allocation0]]
  $region49: #{tpu_custom_call.1} parent=0
    _
  %s7 = ssub.s32 1, %s5
  %s8 = scalar_select 0, %s7, %s5
  $region1: #{tpu_custom_call.1} parent=0
    #allocation2 [shape = 'u8[16384]{0}', space=vmem, size = 0x4000, scoped, tag = 'output window, operand 0']
    #allocation3 [shape = 's32[2]{0}', space=sflag, size = 0x8, scoped, tag = 'scoped memory for tpu_custom_call.1']
    %9 = vsyncpa [#allocation3], 0
    %s10 = scalar_lea.sflag [#allocation3], 1
    %11 = vsyncpa %s10, 0
    loop: start=0, step=1, limit=4
    $region2: #{tpu_custom_call.1} parent=1 // loop_pre_header
      _
    $region3: #{tpu_custom_call.1} parent=1 // loop_header
      %s13 = sphi 0, %s17
      %p14 = scmp.ge.s32.totalorder %s13, 4
      %s20 = sphi 0, %s32
      %s21 = sphi 0, %s28
      %s22 = sphi 0, %s20
      %s23 = sphi 0, %s21
      %s24 = sphi 0, %s22
      %s25 = sphi 0, %s23
      %s35 = sphi 0, %s37
      %s38 = sphi 0, %s35
      %s39 = sphi 0, %s38
      %s55 = sphi 0, %s39
      %s59 = sphi 0, %s59
      %s61 = sphi 0, %s59
      %s62 = sphi 0, %s61
      %s76 = sphi 0, %s62
      %s82 = sphi 0, %s84
      %s85 = sphi 0, %s82
      %s86 = sphi 0, %s85
      %s102 = sphi 0, %s86
      %s108 = sphi 0, %s110
      %s111 = sphi 0, %s108
      %s112 = sphi 0, %s111
      %s128 = sphi 0, %s112
      %s136 = sphi 0, %s138
      %s139 = sphi 0, %s136
      %s140 = sphi 0, %s139
      %s156 = sphi 0, %s140
    $region4: #{tpu_custom_call.1} parent=1 // loop_header_branch
      %16 = sbr.rel (%p14) target = $region8
    $region5: #{tpu_custom_call.1} parent=1 // loop_body
      %s18 = ssub.s32 %s13, 1
      %s19 = ssub.s32 %s13, 2
      %s26 = sadd.s32 1, %s21
      %p27 = scmp.ge.s32.totalorder %s26, 1
      %s28 = scalar_select %p27, 0, %s26
      %s29 = sadd.s32 1, %s20
      %s30 = scalar_select %p27, %s29, %s20
      %p31 = scmp.ge.s32.totalorder %s30, 2
      %s32 = scalar_select %p31, 0, %s30
      %s33 = ssub.s32 %s20, %s32
      %p34 = scmp.eq.s32.totalorder %s33, 0
      %s36 = sadd.s32 %s35, 1
      %s37 = scalar_select %p34, %s35, %s36
      %p40 = pneg %p34
      %p41 = scmp.eq.s32.totalorder %s13, 1
      %p42 = por %p40, %p41
      %p43 = scmp.ne.s32.totalorder %s35, %s38
      %p44 = scmp.eq.s32.totalorder %s13, 0
      %p45 = por %p43, %p44
      %p46 = scmp.ne.s32.totalorder %s35, %s38
      %p47 = scmp.eq.s32.totalorder %s18, 1
      %p48 = por %p46, %p47
      %p49 = scmp.ne.s32.totalorder %s38, %s39
      %p50 = scmp.eq.s32.totalorder %s18, 0
      %p51 = por %p49, %p50
      %p52 = scmp.ne.s32.totalorder %s38, %s39
      %p53 = scmp.eq.s32.totalorder %s19, 1
      %p54 = por %p52, %p53
      %p56 = scmp.ne.s32.totalorder %s39, %s55
      %p57 = scmp.eq.s32.totalorder %s19, 0
      %p58 = por %p56, %p57
      %s60 = sadd.s32 %s59, 1
      %p63 = scmp.eq.s32.totalorder %s13, 1
      %p64 = scmp.ne.s32.totalorder %s59, %s61
      %p65 = scmp.eq.s32.totalorder %s13, 0
      %p66 = por %p64, %p65
      %p67 = scmp.ne.s32.totalorder %s59, %s61
      %p68 = scmp.eq.s32.totalorder %s18, 1
      %p69 = por %p67, %p68
      %p70 = scmp.ne.s32.totalorder %s61, %s62
      %p71 = scmp.eq.s32.totalorder %s18, 0
      %p72 = por %p70, %p71
      %p73 = scmp.ne.s32.totalorder %s61, %s62
      %p74 = scmp.eq.s32.totalorder %s19, 1
      %p75 = por %p73, %p74
      %p77 = scmp.ne.s32.totalorder %s62, %s76
      %p78 = scmp.eq.s32.totalorder %s19, 0
      %p79 = por %p77, %p78
      %s80 = ssub.s32 %s21, %s28
      %p81 = scmp.eq.s32.totalorder %s80, 0
      %s83 = sadd.s32 %s82, 1
      %s84 = scalar_select %p81, %s82, %s83
      %p87 = pneg %p81
      %p88 = scmp.eq.s32.totalorder %s13, 1
      %p89 = por %p87, %p88
      %p90 = scmp.ne.s32.totalorder %s82, %s85
      %p91 = scmp.eq.s32.totalorder %s13, 0
      %p92 = por %p90, %p91
      %p93 = scmp.ne.s32.totalorder %s82, %s85
      %p94 = scmp.eq.s32.totalorder %s18, 1
      %p95 = por %p93, %p94
      %p96 = scmp.ne.s32.totalorder %s85, %s86
      %p97 = scmp.eq.s32.totalorder %s18, 0
      %p98 = por %p96, %p97
      %p99 = scmp.ne.s32.totalorder %s85, %s86
      %p100 = scmp.eq.s32.totalorder %s19, 1
      %p101 = por %p99, %p100
      %p103 = scmp.ne.s32.totalorder %s86, %s102
      %p104 = scmp.eq.s32.totalorder %s19, 0
      %p105 = por %p103, %p104
      %s106 = ssub.s32 %s21, %s28
      %p107 = scmp.eq.s32.totalorder %s106, 0
      %s109 = sadd.s32 %s108, 1
      %s110 = scalar_select %p107, %s108, %s109
      %p113 = pneg %p107
      %p114 = scmp.eq.s32.totalorder %s13, 1
      %p115 = por %p113, %p114
      %p116 = scmp.ne.s32.totalorder %s108, %s111
      %p117 = scmp.eq.s32.totalorder %s13, 0
      %p118 = por %p116, %p117
      %p119 = scmp.ne.s32.totalorder %s108, %s111
      %p120 = scmp.eq.s32.totalorder %s18, 1
      %p121 = por %p119, %p120
      %p122 = scmp.ne.s32.totalorder %s111, %s112
      %p123 = scmp.eq.s32.totalorder %s18, 0
      %p124 = por %p122, %p123
      %p125 = scmp.ne.s32.totalorder %s111, %s112
      %p126 = scmp.eq.s32.totalorder %s19, 1
      %p127 = por %p125, %p126
      %p129 = scmp.ne.s32.totalorder %s112, %s128
      %p130 = scmp.eq.s32.totalorder %s19, 0
      %p131 = por %p129, %p130
      %s132 = ssub.s32 %s20, %s32
      %s133 = ssub.s32 %s21, %s28
      %s134 = sor.u32 %s132, %s133
      %p135 = scmp.eq.s32.totalorder %s134, 0
      %s137 = sadd.s32 %s136, 1
      %s138 = scalar_select %p135, %s136, %s137
      %p141 = pneg %p135
      %p142 = scmp.eq.s32.totalorder %s13, 1
      %p143 = por %p141, %p142
      %p144 = scmp.ne.s32.totalorder %s136, %s139
      %p145 = scmp.eq.s32.totalorder %s13, 0
      %p146 = por %p144, %p145
      %p147 = scmp.ne.s32.totalorder %s136, %s139
      %p148 = scmp.eq.s32.totalorder %s18, 1
      %p149 = por %p147, %p148
      %p150 = scmp.ne.s32.totalorder %s139, %s140
      %p151 = scmp.eq.s32.totalorder %s18, 0
      %p152 = por %p150, %p151
      %p153 = scmp.ne.s32.totalorder %s139, %s140
      %p154 = scmp.eq.s32.totalorder %s19, 1
      %p155 = por %p153, %p154
      %p157 = scmp.ne.s32.totalorder %s140, %s156
      %p158 = scmp.eq.s32.totalorder %s19, 0
      %p159 = por %p157, %p158
      %p160 = scmp.le.s32.totalorder 1, %s13
      %p161 = scmp.lt.s32.totalorder %s13, 3
      %p162 = pnand %p160, %p161
      %p163 = pneg %p162
      // Predicated region
      $region9: #{tpu_custom_call.1} parent=5 // pred_check
        _
      $region10: #{tpu_custom_call.1} parent=5 // pred_check_branch
        %165 = sbr.rel (%p162) target = $region12
      $region11: #{tpu_custom_call.1} parent=5 // pred_region
        %s166 = ssub.s32 %s13, 1
        // Predicated region
        $region13: #{tpu_custom_call.1} parent=11 // pred_check
          %p167 = pneg %p72
        $region14: #{tpu_custom_call.1} parent=11 // pred_check_branch
          %169 = sbr.rel (%p167) target = $region16
        $region15: #{tpu_custom_call.1} parent=11 // pred_region
          _
        $region16: #{tpu_custom_call.1} parent=11 // pred_fallthru
          _
        // Predicated region
        $region17: #{tpu_custom_call.1} parent=11 // pred_check
          %p170 = pneg %p98
        $region18: #{tpu_custom_call.1} parent=11 // pred_check_branch
          %172 = sbr.rel (%p170) target = $region20
        $region19: #{tpu_custom_call.1} parent=11 // pred_region
          %p173 = scmp.lt.s32.totalorder %s23, 0
          %s174 = scalar_select %p173, %s23, 0
          %s175 = smul.addr %s174, 4
          %s176 = scalar_lea.vmem %s2, %s175
        $region20: #{tpu_custom_call.1} parent=11 // pred_fallthru
          _
        // Predicated region
        $region21: #{tpu_custom_call.1} parent=11 // pred_check
          %p177 = pneg %p124
        $region22: #{tpu_custom_call.1} parent=11 // pred_check_branch
          %179 = sbr.rel (%p177) target = $region24
        $region23: #{tpu_custom_call.1} parent=11 // pred_region
          %p180 = scmp.lt.s32.totalorder %s23, 0
          %s181 = scalar_select %p180, %s23, 0
          %s182 = scalar_lea.vmem %s3, %s181
        $region24: #{tpu_custom_call.1} parent=11 // pred_fallthru
          _
      $region12: #{tpu_custom_call.1} parent=5 // pred_fallthru
        _
      %p183 = scmp.lt.s32.totalorder %s13, 2
      // Predicated region
      $region25: #{tpu_custom_call.1} parent=5 // pred_check
        %p184 = pneg %p183
      $region26: #{tpu_custom_call.1} parent=5 // pred_check_branch
        %186 = sbr.rel (%p184) target = $region28
      $region27: #{tpu_custom_call.1} parent=5 // pred_region
        // Predicated region
        $region29: #{tpu_custom_call.1} parent=27 // pred_check
          %p187 = pneg %p45
        $region30: #{tpu_custom_call.1} parent=27 // pred_check_branch
          %189 = sbr.rel (%p187) target = $region32
        $region31: #{tpu_custom_call.1} parent=27 // pred_region
          %s190 = smul.u32 4, %s20
          %p191 = scmp.lt.s32.totalorder %s190, 7
          %s192 = scalar_select %p191, %s190, 7
          %s193 = smul.addr %s192, 8
          %s194 = scalar_lea.vmem %s0, %s193
          %s195 = smul.u32 4, %s20
        $region32: #{tpu_custom_call.1} parent=27 // pred_fallthru
          _
      $region28: #{tpu_custom_call.1} parent=5 // pred_fallthru
        _
      %p196 = scmp.le.s32.totalorder 1, %s13
      %p197 = scmp.lt.s32.totalorder %s13, 3
      %p198 = pnand %p196, %p197
      %p199 = pneg %p198
      // Predicated region
      $region33: #{tpu_custom_call.1} parent=5 // pred_check
        _
      $region34: #{tpu_custom_call.1} parent=5 // pred_check_branch
        %201 = sbr.rel (%p198) target = $region36
      $region35: #{tpu_custom_call.1} parent=5 // pred_region
        %s202 = ssub.s32 %s13, 1
        %s203 = smul.u32 4, %s22
        %p204 = scmp.lt.s32.totalorder %s203, 7
        %s205 = scalar_select %p204, %s203, 7
        %s206 = smul.addr %s205, 8
        %s207 = scalar_lea.vmem %s0, %s206
        %p208 = pneg %p51
        %p209 = pneg %p48
        %p210 = pneg %p72
        %p211 = pneg %p69
        %p212 = scmp.lt.s32.totalorder %s23, 0
        %s213 = scalar_select %p212, %s23, 0
        %s214 = smul.addr %s213, 4
        %s215 = scalar_lea.vmem %s2, %s214
        %p216 = pneg %p98
        %p217 = pneg %p95
        %p218 = scmp.lt.s32.totalorder %s23, 0
        %s219 = scalar_select %p218, %s23, 0
        %s220 = scalar_lea.vmem %s3, %s219
        %p221 = pneg %p124
        %p222 = pneg %p121
        %p223 = pneg %p152
        %p224 = pneg %p149
        %s225 = sand.u32 %s139, 1
        %s226 = scalar_lea.sflag [#allocation3], %s225
        %s227 = sand.u32 %s139, 1
        %s228 = smul.addr %s227, 16
        %s229 = scalar_lea.vmem [#allocation2], %s228
        %s230 = smul.u32 4, %s22
        %p231 = scmp.lt.s32.totalorder %s230, 7
        %s232 = scalar_select %p231, %s230, 7
        %s233 = smul.addr %s232, 8
        %s234 = scalar_lea.vmem %s0, %s233
        %s235 = smul.u32 4, %s22
        %p236 = scmp.lt.s32.totalorder %s23, 0
        %s237 = scalar_select %p236, %s23, 0
        %s238 = smul.addr %s237, 4
        %s239 = scalar_lea.vmem %s2, %s238
        %p240 = scmp.lt.s32.totalorder %s23, 0
        %s241 = scalar_select %p240, %s23, 0
        %s242 = scalar_lea.vmem %s3, %s241
        %s243 = smul.u32 4, %s22
        %v245 = vld [vmem:[%s234] sm:$0xff]
        %v246 = vld [vmem:[%s234 + $0x8] sm:$0xff]
        %v247 = vld [vmem:[%s234 + $0x10] sm:$0xff]
        %v248 = vld [vmem:[%s234 + $0x18] sm:$0xff]
        %v249 = vld [vmem:[%s1] sm:$0x3]
        %vm250 = vcmask 261120
        %v251 = vsel %vm250, %v245, 0.0
        %252 = vadd.xlane.f32.xlu0 %v251
        %v253 = vpop.xlane.xlu0 %252
        %v254 = vsel %vm250, %v246, 0.0
        %255 = vadd.xlane.f32.xlu0 %v254
        %v256 = vpop.xlane.xlu0 %255
        %v257 = vsel %vm250, %v247, 0.0
        %258 = vadd.xlane.f32.xlu0 %v257
        %v259 = vpop.xlane.xlu0 %258
        %v260 = vsel %vm250, %v248, 0.0
        %261 = vadd.xlane.f32.xlu0 %v260
        %v262 = vpop.xlane.xlu0 %261
        %v263 = vmul.f32 %v245, %v245
        %v264 = vmul.f32 %v246, %v246
        %v265 = vmul.f32 %v247, %v247
        %v266 = vmul.f32 %v248, %v248
        %v267 = vsel %vm250, %v263, 0.0
        %268 = vadd.xlane.f32.xlu0 %v267
        %v269 = vpop.xlane.xlu0 %268
        %v270 = vsel %vm250, %v264, 0.0
        %271 = vadd.xlane.f32.xlu0 %v270
        %v272 = vpop.xlane.xlu0 %271
        %v273 = vsel %vm250, %v265, 0.0
        %274 = vadd.xlane.f32.xlu0 %v273
        %v275 = vpop.xlane.xlu0 %274
        %v276 = vsel %vm250, %v266, 0.0
        %277 = vadd.xlane.f32.xlu0 %v276
        %v278 = vpop.xlane.xlu0 %277
        %v279 = vmul.f32 %v253, 0.03125
        %v280 = vmul.f32 %v256, 0.03125
        %v281 = vmul.f32 %v259, 0.03125
        %v282 = vmul.f32 %v262, 0.03125
        %v283 = vmul.f32 %v269, 0.03125
        %v284 = vmul.f32 %v272, 0.03125
        %v285 = vmul.f32 %v275, 0.03125
        %v286 = vmul.f32 %v278, 0.03125
        %v287 = vmul.f32 %v279, %v279
        %v288 = vmul.f32 %v280, %v280
        %v289 = vmul.f32 %v281, %v281
        %v290 = vmul.f32 %v282, %v282
        %v291 = vsub.f32 %v283, %v287
        %v292 = vsub.f32 %v284, %v288
        %v293 = vsub.f32 %v285, %v289
        %v294 = vsub.f32 %v286, %v290
        %v295 = vmax.f32 %v291, 0.0
        %v296 = vmax.f32 %v292, 0.0
        %v297 = vmax.f32 %v293, 0.0
        %v298 = vmax.f32 %v294, 0.0
        %v299 = vsub.f32 %v245, %v279
        %v300 = vsub.f32 %v246, %v280
        %v301 = vsub.f32 %v247, %v281
        %v302 = vsub.f32 %v248, %v282
        %v303 = vadd.f32 %v295, 1e-05
        %v304 = vadd.f32 %v296, 1e-05
        %v305 = vadd.f32 %v297, 1e-05
        %v306 = vadd.f32 %v298, 1e-05
        %v307 = vrsqrt.pop %v303
        %v308 = vrsqrt.pop %v304
        %v309 = vrsqrt.pop %v305
        %v310 = vrsqrt.pop %v306
        %v311 = vmul.f32 %v299, %v307
        %v312 = vmul.f32 %v300, %v308
        %v313 = vmul.f32 %v301, %v309
        %v314 = vmul.f32 %v302, %v310
        %v315 = vlaneseq
        %v316 = vshrl.u32 %v315, 7
        %v317 = vsub.s32 0, %v316
        %v318 = vrot.slane %v249, %v317
        %v319 = vmul.f32 %v311, %v318
        %v320 = vmul.f32 %v312, %v318
        %v321 = vmul.f32 %v313, %v318
        %v322 = vmul.f32 %v314, %v318
        %v323 = vlaneseq
        %v324 = vshrl.u32 %v323, 7
        %v325 = vsub.s32 1, %v324
        %v326 = vrot.slane %v249, %v325
        %v327 = vadd.f32 %v319, %v326
        %v328 = vadd.f32 %v320, %v326
        %v329 = vadd.f32 %v321, %v326
        %v330 = vadd.f32 %v322, %v326
        %v331 = vpack.c.bf16 %v328, %v327
        %v332 = vpack.c.bf16 %v330, %v329
        %v333 = vld [vmem:[%s239] sm:$0xf]
        %v334 = vld [vmem:[%s239 + $0x4] sm:$0xf]
        %v335 = vld [vmem:[%s239 + $0x8] sm:$0xf]
        %v336 = vld [vmem:[%s239 + $0xc] sm:$0xf]
        %v337 = vld [vmem:[%s242] sm:$0x1]
        %v339 = vlaneseq
        %v340 = vshrl.u32 %v339, 7
        %v341 = vsub.s32 0, %v340
        %v342 = vrot.slane %v337, %v341
        %v348 = vunpack.c.l.b16 %v333
        %v349 = vunpack.c.l.b16 %v334
        %v350 = vunpack.c.l.b16 %v335
        %v351 = vunpack.c.l.b16 %v336
        %v352 = vpack.c.b16 %v349, %v348
        %v353 = vpack.c.b16 %v351, %v350
        %v357 = vsel %vm250, %v331, 0
        %v360 = vsel %vm250, %v332, 0
        %362 = vmatprep.subr.bf16.mxu0 0
        %363 = vmatpush1.bf16.msra.mxu0 %v352
        %364 = vmatprep.subr.bf16.mxu0 0
        %365 = vmatpush1.bf16.msra.mxu0 %v353
        %366 = vmatprep.subr.bf16.mxu0 0
        %367 = vmatpush1.bf16.msra.mxu0 0
        %368 = vmatprep.subr.bf16.mxu0 0
        %369 = vmatpush1.bf16.msra.mxu0 0
        %370 = vmatprep.subr.bf16.mxu0 0
        %371 = vmatpush1.bf16.msra.mxu0 0
        %372 = vmatprep.subr.bf16.mxu0 0
        %373 = vmatpush1.bf16.msra.mxu0 0
        %374 = vmatprep.subr.bf16.mxu0 0
        %375 = vmatpush1.bf16.msra.mxu0 0
        %376 = vmatprep.subr.bf16.mxu0 0
        %377 = vmatpush1.bf16.msra.mxu0 0
        %378 = vmatprep.subr.bf16.mxu0 0
        %379 = vmatpush1.bf16.msra.mxu0 0
        %380 = vmatprep.subr.bf16.mxu0 0
        %381 = vmatpush1.bf16.msra.mxu0 0
        %382 = vmatprep.subr.bf16.mxu0 0
        %383 = vmatpush1.bf16.msra.mxu0 0
        %384 = vmatprep.subr.bf16.mxu0 0
        %385 = vmatpush1.bf16.msra.mxu0 0
        %386 = vmatprep.subr.bf16.mxu0 0
        %387 = vmatpush1.bf16.msra.mxu0 0
        %388 = vmatprep.subr.bf16.mxu0 0
        %389 = vmatpush1.bf16.msra.mxu0 0
        %390 = vmatprep.subr.bf16.mxu0 0
        %391 = vmatpush1.bf16.msra.mxu0 0
        %392 = vmatprep.subr.bf16.mxu0 0
        %393 = vmatpush1.bf16.msra.mxu0 0
        %394 = vmatprep.mubr.bf16.mxu0 0
        %395 = vmatmul.mubr.bf16.gmra.mrb[0].mxu0 %v357
        %v396 = vpop.f32.mrb[0].mxu0
        %v397 = vadd.f32 %v342, %v396
        %v398 = vpop.f32.mrb[0].mxu0
        %v399 = vpop.f32.mrb[0].mxu0
        %v400 = vadd.f32 %v342, %v399
        %v401 = vpop.f32.mrb[0].mxu0
        %402 = vmatprep.mubr.bf16.mxu0 0
        %403 = vmatmul.mubr.bf16.gmra.mrb[0].mxu0 %v360
        %v404 = vpop.f32.mrb[0].mxu0
        %v405 = vadd.f32 %v342, %v404
        %v406 = vpop.f32.mrb[0].mxu0
        %v407 = vpop.f32.mrb[0].mxu0
        %v408 = vadd.f32 %v342, %v407
        %v409 = vpop.f32.mrb[0].mxu0
        %410 = vdwg.mxu0
        %v411 = vpack.c.bf16 %v400, %v397
        %v412 = vpack.c.bf16 %v408, %v405
        %v415 = vunpack.c.l.b16 %v411
        %v416 = vunpack.c.h.b16 %v411
        %v417 = vunpack.c.l.b16 %v412
        %v418 = vunpack.c.h.b16 %v412
        %v419 = vpack.c.b16 %v415, %v415
        %v420 = vpack.c.b16 %v416, %v416
        %v421 = vpack.c.b16 %v417, %v417
        %v422 = vpack.c.b16 %v418, %v418
        %vm427 = vcmask 781312
        %428 = vst.msk [vmem:[%s229] sm:$0xf] %vm427, %v419
        %429 = vst.msk [vmem:[%s229 + $0x4] sm:$0xf] %vm427, %v420
        %430 = vst.msk [vmem:[%s229 + $0x8] sm:$0xf] %vm427, %v421
        %431 = vst.msk [vmem:[%s229 + $0xc] sm:$0xf] %vm427, %v422
        %s432 = sand.u32 %s139, 1
        %s433 = scalar_lea.sflag [#allocation3], %s432
        %s434 = sand.u32 %s139, 1
        %s435 = smul.addr %s434, 16
        %s436 = scalar_lea.vmem [#allocation2], %s435
        // Predicated region
        $region37: #{tpu_custom_call.1} parent=35 // pred_check
          %p437 = pneg %p149
        $region38: #{tpu_custom_call.1} parent=35 // pred_check_branch
          %439 = sbr.rel (%p437) target = $region40
        $region39: #{tpu_custom_call.1} parent=35 // pred_region
          %s440 = smul.u32 4, %s22
          %s442 = ssub.s32 256, 256
          %443 = vsyncadd %s433, %s442
          %s444 = sadd.s32 %s23, %s440
          %s445 = smul.addr %s444, 64
          %s446 = scalar_lea.hbm %s4, %s445
          %s447 = sshll.u32 %s436, 4
          %s448 = int_to_ptr.vmem [resolvable:$true] %s447
          %453 = dma.vmem_to_hbm [thread:$0]  %s448, 256, %s446, %s433, 64, 64, 4
        $region40: #{tpu_custom_call.1} parent=35 // pred_fallthru
          _
      $region36: #{tpu_custom_call.1} parent=5 // pred_fallthru
        _
      %p454 = scmp.le.s32.totalorder 2, %s13
      // Predicated region
      $region41: #{tpu_custom_call.1} parent=5 // pred_check
        %p455 = pneg %p454
      $region42: #{tpu_custom_call.1} parent=5 // pred_check_branch
        %457 = sbr.rel (%p455) target = $region44
      $region43: #{tpu_custom_call.1} parent=5 // pred_region
        %s458 = ssub.s32 %s13, 2
        // Predicated region
        $region45: #{tpu_custom_call.1} parent=43 // pred_check
          %p459 = pneg %p155
        $region46: #{tpu_custom_call.1} parent=43 // pred_check_branch
          %461 = sbr.rel (%p459) target = $region48
        $region47: #{tpu_custom_call.1} parent=43 // pred_region
          %s462 = sand.u32 %s140, 1
          %s463 = scalar_lea.sflag [#allocation3], %s462
          %s464 = sand.u32 %s140, 1
          %s465 = smul.addr %s464, 16
          %s466 = scalar_lea.vmem [#allocation2], %s465
          %467 = dma.done %s463, 256
        $region48: #{tpu_custom_call.1} parent=43 // pred_fallthru
          _
      $region44: #{tpu_custom_call.1} parent=5 // pred_fallthru
        _
    $region6: #{tpu_custom_call.1} parent=1 // loop_footer
      %s17 = sadd.s32 1, %s13
    $region7: #{tpu_custom_call.1} parent=1 // loop_footer_branch
      %12 = sbr.rel target = $region3
    $region8: #{tpu_custom_call.1} parent=1 // loop_exit
      _
    %468 = vsyncpa [#allocation3], 1
    %s469 = scalar_lea.sflag [#allocation3], 1
    %470 = vsyncpa %s469, 1

</llo_original>
